<compile_context>
chip_gen: v6e
topology: v6e:2x2x1
jax: 0.10.0
libtpu: 0.0.40
codegen_flags: <defaults>
</compile_context>

<pallas_src>
import functools

import jax
import jax.numpy as jnp
from jax.experimental import pallas as pl
from jax.experimental.pallas import tpu as pltpu

INPUT_DIM = 2
HIDDEN1 = 128
HIDDEN2 = 64
NUM_ACTIONS = 5  # output_dim

_TB_MAX = 2048          # rows-per-tile cap: per-step VMEM stays well inside v5e's 16 MiB scoped default
_MEGACORE_MIN_B = 1024  # above this, use >=2 (even #) grid steps so v7x megacore uses both TCs


def dqn_kernel(x_ref, w1_ref, b1_ref, w2_ref, b2_ref, w3_ref, b3_ref, o_ref):
    # ---- Layer 1 on the MXU (otherwise idle): bf16 (tb,2)@(2,128), f32 accumulate ----
    h1 = jnp.dot(x_ref[...], w1_ref[...], preferred_element_type=jnp.float32)
    h1 = jnp.maximum(h1 + b1_ref[...], 0.0).astype(jnp.bfloat16)

    # ---- Layer 2 on the MXU: bf16 (tb,128)@(128,64), f32 accumulate ----
    h2 = jnp.dot(h1, w2_ref[...], preferred_element_type=jnp.float32)
    h2 = jnp.maximum(h2 + b2_ref[...], 0.0).astype(jnp.bfloat16)

    # ---- Layer 3 on the MXU: bf16 (tb,64)@(64,5), f32 accumulate ----
    o = jnp.dot(h2, w3_ref[...], preferred_element_type=jnp.float32) + b3_ref[...]
    # NUM_ACTIONS=5 -> masked (vst.msk) store; deliberately NOT padded to 128 lanes.
    o_ref[...] = o.astype(o_ref.dtype)


def _round_up(n, m):
    return ((n + m - 1) // m) * m


def _choose_tile(batch, tile_b):
    """Rows per tile: balanced tiles (<8 padded rows total), capped at _TB_MAX,
    and an even number of tiles for batches >= _MEGACORE_MIN_B (v7x megacore)."""
    if tile_b is not None:
        tb = int(tile_b)
        assert tb % 8 == 0, "tile_b must be a multiple of 8"
        return tb
    n_tiles = pl.cdiv(batch, _TB_MAX)
    if batch >= _MEGACORE_MIN_B:
        n_tiles = max(n_tiles, 2)
        n_tiles += n_tiles % 2  # even # of tiles load-balances the two v7x TensorCores
    return _round_up(pl.cdiv(batch, n_tiles), 8)


def prepare_params(params):
    """One-time (per parameter update) cast of weights to kernel dtypes.

    Hoists the f32->bf16 weight converts out of the per-forward path; biases stay
    f32 and are added to the f32 MXU accumulators inside the kernel.
    """
    w1, b1, w2, b2, w3, b3 = params
    return (w1.astype(jnp.bfloat16), b1.astype(jnp.float32),
            w2.astype(jnp.bfloat16), b2.astype(jnp.float32),
            w3.astype(jnp.bfloat16), b3.astype(jnp.float32))


@functools.partial(jax.jit, static_argnames=("tile_b",))
def dqn_forward(x, kernel_params, *, tile_b=None):
    """Fused DQN forward. `kernel_params` must come from prepare_params()."""
    B = x.shape[0]
    w1, b1, w2, b2, w3, b3 = kernel_params

    tb = _choose_tile(B, tile_b)
    n_grid = pl.cdiv(B, tb)
    B_pad = tb * n_grid

    x = x.astype(jnp.bfloat16)  # bf16 operand into the layer-1 MXU pass
    if B_pad != B:
        # Padded rows run through the full net (bias-driven nonzero outputs) and are
        # sliced off below; any future in-kernel batch reduction must mask them.
        x = jnp.pad(x, ((0, B_pad - B), (0, 0)))

    in_specs = [
        pl.BlockSpec((tb, INPUT_DIM), lambda i: (i, 0)),          # x tile (bf16)
        pl.BlockSpec((INPUT_DIM, HIDDEN1), lambda i: (0, 0)),     # w1 (bf16)
        pl.BlockSpec((1, HIDDEN1), lambda i: (0, 0)),             # b1 (f32)
        pl.BlockSpec((HIDDEN1, HIDDEN2), lambda i: (0, 0)),       # w2 (bf16)
        pl.BlockSpec((1, HIDDEN2), lambda i: (0, 0)),             # b2 (f32)
        pl.BlockSpec((HIDDEN2, NUM_ACTIONS), lambda i: (0, 0)),   # w3 (bf16)
        pl.BlockSpec((1, NUM_ACTIONS), lambda i: (0, 0)),         # b3 (f32)
    ]
    out_spec = pl.BlockSpec((tb, NUM_ACTIONS), lambda i: (i, 0))

    flops = 2 * B_pad * (INPUT_DIM * HIDDEN1 + HIDDEN1 * HIDDEN2
                         + HIDDEN2 * NUM_ACTIONS)
    weight_bytes = (2 * (INPUT_DIM * HIDDEN1 + HIDDEN1 * HIDDEN2
                         + HIDDEN2 * NUM_ACTIONS)
                    + 4 * (HIDDEN1 + HIDDEN2 + NUM_ACTIONS))
    bytes_accessed = (2 * B_pad * INPUT_DIM          # bf16 x
                      + 4 * B_pad * NUM_ACTIONS      # f32 out
                      + weight_bytes)

    out = pl.pallas_call(
        dqn_kernel,
        out_shape=jax.ShapeDtypeStruct((B_pad, NUM_ACTIONS), jnp.float32),
        grid_spec=pltpu.PrefetchScalarGridSpec(
            num_scalar_prefetch=0,
            grid=(n_grid,),
            in_specs=in_specs,
            out_specs=out_spec,
        ),
        compiler_params=pltpu.CompilerParams(
            dimension_semantics=("parallel",),
            vmem_limit_bytes=32 * 1024 * 1024,
        ),
        cost_estimate=pl.CostEstimate(
            flops=flops, transcendentals=0, bytes_accessed=bytes_accessed),
    )(x, w1, b1, w2, b2, w3, b3)

    return out[:B] if B_pad != B else out


def init_params(key):
    """Deterministic init mimicking nn.Linear default (U[-1/sqrt(fan_in), 1/sqrt(fan_in)])."""
    def linear(k, fan_in, fan_out):
        kw, kb = jax.random.split(k)
        bound = 1.0 / jnp.sqrt(fan_in)
        w = jax.random.uniform(kw, (fan_in, fan_out), jnp.float32, -bound, bound)
        b = jax.random.uniform(kb, (1, fan_out), jnp.float32, -bound, bound)
        return w, b

    k1, k2, k3 = jax.random.split(key, 3)
    w1, b1 = linear(k1, INPUT_DIM, HIDDEN1)
    w2, b2 = linear(k2, HIDDEN1, HIDDEN2)
    w3, b3 = linear(k3, HIDDEN2, NUM_ACTIONS)
    return (w1, b1, w2, b2, w3, b3)


def dqn_reference(x, params):
    """Pure-JAX f32 reference (PyTorch-equivalent forward)."""
    w1, b1, w2, b2, w3, b3 = params
    h1 = jnp.maximum(x @ w1 + b1, 0.0)
    h2 = jnp.maximum(h1 @ w2 + b2, 0.0)
    return h2 @ w3 + b3


if __name__ == "__main__":
    key = jax.random.PRNGKey(0)
    kx, kp = jax.random.split(key)

    params = init_params(kp)
    kparams = prepare_params(params)   # bf16 weight copies, refreshed once per update

    # Small acting-path batch.
    B = 8
    x = jax.random.normal(kx, (B, INPUT_DIM), jnp.float32)
    out = jax.block_until_ready(dqn_forward(x, kparams))
    ref = dqn_reference(x, params)
    assert out.shape == (B, NUM_ACTIONS)
    # bf16 operands (f32 accumulation) on all layers -> ~1e-2 level deviation vs f32 ref.
    # (For greedy-action use, argmax agreement vs the f32 reference should also be
    #  monitored when actions are near-tied.)
    assert jnp.allclose(out, ref, atol=3e-2, rtol=3e-2), "mismatch vs reference"

    # Multi-tile (grid > 1, padded ragged tail) path.
    B2 = 100
    x2 = jax.random.normal(jax.random.PRNGKey(1), (B2, INPUT_DIM), jnp.float32)
    out2 = jax.block_until_ready(dqn_forward(x2, kparams, tile_b=32))
    ref2 = dqn_reference(x2, params)
    assert out2.shape == (B2, NUM_ACTIONS)
    assert jnp.allclose(out2, ref2, atol=3e-2, rtol=3e-2), "mismatch vs reference (tiled)"

    print("KERNEL_OK")
</pallas_src>

<mosaic_0001>
module attributes {stable_mosaic.version = 11 : i64} {
  func.func @dqn_kernel(%arg0: i32, %arg1: memref<8x2xbf16, #tpu.memory_space<vmem>>, %arg2: memref<2x128xbf16, #tpu.memory_space<vmem>>, %arg3: memref<1x128xf32, #tpu.memory_space<vmem>>, %arg4: memref<128x64xbf16, #tpu.memory_space<vmem>>, %arg5: memref<1x64xf32, #tpu.memory_space<vmem>>, %arg6: memref<64x5xbf16, #tpu.memory_space<vmem>>, %arg7: memref<1x5xf32, #tpu.memory_space<vmem>>, %arg8: memref<8x5xf32, #tpu.memory_space<vmem>>) attributes {dimension_semantics = [#tpu.dimension_semantics<parallel>], iteration_bounds = array<i64: 1>, scalar_prefetch = 0 : i64, scratch_operands = 0 : i64, tpu.core_type = #tpu.core_type<tc>, window_params = [{transform_indices = @transform_0, window_bounds = array<i64: 8, 2>}, {pipeline_mode = #tpu.pipeline_mode<synchronous>, transform_indices = @transform_1, window_bounds = array<i64: 2, 128>}, {pipeline_mode = #tpu.pipeline_mode<synchronous>, transform_indices = @transform_2, window_bounds = array<i64: 1, 128>}, {pipeline_mode = #tpu.pipeline_mode<synchronous>, transform_indices = @transform_3, window_bounds = array<i64: 128, 64>}, {pipeline_mode = #tpu.pipeline_mode<synchronous>, transform_indices = @transform_4, window_bounds = array<i64: 1, 64>}, {pipeline_mode = #tpu.pipeline_mode<synchronous>, transform_indices = @transform_5, window_bounds = array<i64: 64, 5>}, {pipeline_mode = #tpu.pipeline_mode<synchronous>, transform_indices = @transform_6, window_bounds = array<i64: 1, 5>}, {transform_indices = @transform_7, window_bounds = array<i64: 8, 5>}]} {
    %c0 = arith.constant 0 : index
    %c0_0 = arith.constant 0 : index
    %0 = vector.load %arg1[%c0, %c0_0] : memref<8x2xbf16, #tpu.memory_space<vmem>>, vector<8x2xbf16>
    %c0_1 = arith.constant 0 : index
    %c0_2 = arith.constant 0 : index
    %1 = vector.load %arg2[%c0_1, %c0_2] : memref<2x128xbf16, #tpu.memory_space<vmem>>, vector<2x128xbf16>
    %cst = arith.constant dense<0.000000e+00> : vector<8x128xf32>
    %2 = tpu.matmul %0, %1, %cst {dimension_numbers = #tpu.dot_dimension_numbers<[1], [0], [0], [1], [0, 0, 1, 1], [], []>} : vector<8x2xbf16>, vector<2x128xbf16>, vector<8x128xf32> -> vector<8x128xf32>
    %c0_3 = arith.constant 0 : index
    %c0_4 = arith.constant 0 : index
    %3 = vector.load %arg3[%c0_3, %c0_4] : memref<1x128xf32, #tpu.memory_space<vmem>>, vector<1x128xf32>
    %4 = vector.broadcast %3 : vector<1x128xf32> to vector<8x128xf32>
    %5 = arith.addf %2, %4 : vector<8x128xf32>
    %cst_5 = arith.constant 0.000000e+00 : f32
    %6 = vector.broadcast %cst_5 : f32 to vector<8x128xf32>
    %7 = arith.maximumf %5, %6 : vector<8x128xf32>
    %8 = arith.truncf %7 : vector<8x128xf32> to vector<8x128xbf16>
    %c0_6 = arith.constant 0 : index
    %c0_7 = arith.constant 0 : index
    %9 = vector.load %arg4[%c0_6, %c0_7] : memref<128x64xbf16, #tpu.memory_space<vmem>>, vector<128x64xbf16>
    %cst_8 = arith.constant dense<0.000000e+00> : vector<8x64xf32>
    %10 = tpu.matmul %8, %9, %cst_8 {dimension_numbers = #tpu.dot_dimension_numbers<[1], [0], [0], [1], [0, 0, 1, 1], [], []>} : vector<8x128xbf16>, vector<128x64xbf16>, vector<8x64xf32> -> vector<8x64xf32>
    %c0_9 = arith.constant 0 : index
    %c0_10 = arith.constant 0 : index
    %11 = vector.load %arg5[%c0_9, %c0_10] : memref<1x64xf32, #tpu.memory_space<vmem>>, vector<1x64xf32>
    %12 = vector.broadcast %11 : vector<1x64xf32> to vector<8x64xf32>
    %13 = arith.addf %10, %12 : vector<8x64xf32>
    %cst_11 = arith.constant 0.000000e+00 : f32
    %14 = vector.broadcast %cst_11 : f32 to vector<8x64xf32>
    %15 = arith.maximumf %13, %14 : vector<8x64xf32>
    %16 = arith.truncf %15 : vector<8x64xf32> to vector<8x64xbf16>
    %c0_12 = arith.constant 0 : index
    %c0_13 = arith.constant 0 : index
    %17 = vector.load %arg6[%c0_12, %c0_13] : memref<64x5xbf16, #tpu.memory_space<vmem>>, vector<64x5xbf16>
    %cst_14 = arith.constant dense<0.000000e+00> : vector<8x5xf32>
    %18 = tpu.matmul %16, %17, %cst_14 {dimension_numbers = #tpu.dot_dimension_numbers<[1], [0], [0], [1], [0, 0, 1, 1], [], []>} : vector<8x64xbf16>, vector<64x5xbf16>, vector<8x5xf32> -> vector<8x5xf32>
    %c0_15 = arith.constant 0 : index
    %c0_16 = arith.constant 0 : index
    %19 = vector.load %arg7[%c0_15, %c0_16] : memref<1x5xf32, #tpu.memory_space<vmem>>, vector<1x5xf32>
    %20 = vector.broadcast %19 : vector<1x5xf32> to vector<8x5xf32>
    %21 = arith.addf %18, %20 : vector<8x5xf32>
    %c0_17 = arith.constant 0 : index
    %c0_18 = arith.constant 0 : index
    %22 = vector.load %arg8[%c0_17, %c0_18] : memref<8x5xf32, #tpu.memory_space<vmem>>, vector<8x5xf32>
    tpu.vector_store %arg8[%c0_17, %c0_18], %21 {strides = array<i32>} : memref<8x5xf32, #tpu.memory_space<vmem>>, vector<8x5xf32>,
    return
  }
  func.func @transform_0(%arg0: i32) -> (i32, i32) {
    %c0_i32 = arith.constant 0 : i32
    %c0_i32_0 = arith.constant 0 : i32
    return %arg0, %c0_i32 : i32, i32
  }
  func.func @transform_1(%arg0: i32) -> (i32, i32) {
    %c0_i32 = arith.constant 0 : i32
    %c0_i32_0 = arith.constant 0 : i32
    %c0_i32_1 = arith.constant 0 : i32
    return %c0_i32, %c0_i32_0 : i32, i32
  }
  func.func @transform_2(%arg0: i32) -> (i32, i32) {
    %c0_i32 = arith.constant 0 : i32
    %c0_i32_0 = arith.constant 0 : i32
    %c0_i32_1 = arith.constant 0 : i32
    return %c0_i32, %c0_i32_0 : i32, i32
  }
  func.func @transform_3(%arg0: i32) -> (i32, i32) {
    %c0_i32 = arith.constant 0 : i32
    %c0_i32_0 = arith.constant 0 : i32
    %c0_i32_1 = arith.constant 0 : i32
    return %c0_i32, %c0_i32_0 : i32, i32
  }
  func.func @transform_4(%arg0: i32) -> (i32, i32) {
    %c0_i32 = arith.constant 0 : i32
    %c0_i32_0 = arith.constant 0 : i32
    %c0_i32_1 = arith.constant 0 : i32
    return %c0_i32, %c0_i32_0 : i32, i32
  }
  func.func @transform_5(%arg0: i32) -> (i32, i32) {
    %c0_i32 = arith.constant 0 : i32
    %c0_i32_0 = arith.constant 0 : i32
    %c0_i32_1 = arith.constant 0 : i32
    return %c0_i32, %c0_i32_0 : i32, i32
  }
  func.func @transform_6(%arg0: i32) -> (i32, i32) {
    %c0_i32 = arith.constant 0 : i32
    %c0_i32_0 = arith.constant 0 : i32
    %c0_i32_1 = arith.constant 0 : i32
    return %c0_i32, %c0_i32_0 : i32, i32
  }
  func.func @transform_7(%arg0: i32) -> (i32, i32) {
    %c0_i32 = arith.constant 0 : i32
    %c0_i32_0 = arith.constant 0 : i32
    return %arg0, %c0_i32 : i32, i32
  }
}

</mosaic_0001>

<llo_original>
// kernel: dqn_forward.1
$region0: #{dqn_forward.1}
  #allocation0 [shape = 'u32[]', space=smem, size = 0x4, offset = 0x4, fixed_abs, tag = 'smem constant byte address 0x4 - core index']
  #allocation1 [shape = 'u32[144,128]{1,0:T(1,128)}', space=vmem, size = 0x12000, scoped, tag = 'internal scratch']
  %s0 = inlined_call_operand.vmem [shape: bf16[8,2], index: 0, kind: input, shape index: {}]
  %s1 = inlined_call_operand.vmem [shape: bf16[2,128], index: 1, kind: input, shape index: {}]
  %s2 = inlined_call_operand.vmem [shape: f32[1,128], index: 2, kind: input, shape index: {}]
  %s3 = inlined_call_operand.vmem [shape: bf16[128,64], index: 3, kind: input, shape index: {}]
  %s4 = inlined_call_operand.vmem [shape: f32[1,64], index: 4, kind: input, shape index: {}]
  %s5 = inlined_call_operand.vmem [shape: bf16[64,5], index: 5, kind: input, shape index: {}]
  %s6 = inlined_call_operand.vmem [shape: f32[1,5], index: 6, kind: input, shape index: {}]
  %s7 = inlined_call_operand.hbm [shape: f32[8,5], index: 7, kind: output, shape index: {}]
  %s8 = sld [smem:[#allocation0]]
  $region38: #{dqn_forward.1} parent=0
    _
  %s10 = ssub.s32 1, %s8
  %s11 = scalar_select 0, %s10, %s8
  $region1: #{dqn_forward.1} parent=0
    #allocation2 [shape = 'u8[4096]{0}', space=vmem, size = 0x1000, scoped, tag = 'output window, operand 0, single buffered']
    #allocation3 [shape = 's32[1]{0}', space=sflag, size = 0x4, scoped, tag = 'scoped memory for dqn_forward.1']
    %12 = vsyncpa [#allocation3], 0
    // Predicated region
    $region2: #{dqn_forward.1} parent=1 // pred_check
      _
    $region3: #{dqn_forward.1} parent=1 // pred_check_branch
      %14 = sbr.rel (0) target = $region5
    $region4: #{dqn_forward.1} parent=1 // pred_region
      _
    $region5: #{dqn_forward.1} parent=1 // pred_fallthru
      _
    // Predicated region
    $region6: #{dqn_forward.1} parent=1 // pred_check
      _
    $region7: #{dqn_forward.1} parent=1 // pred_check_branch
      %16 = sbr.rel (0) target = $region9
    $region8: #{dqn_forward.1} parent=1 // pred_region
      _
    $region9: #{dqn_forward.1} parent=1 // pred_fallthru
      _
    // Predicated region
    $region10: #{dqn_forward.1} parent=1 // pred_check
      _
    $region11: #{dqn_forward.1} parent=1 // pred_check_branch
      %18 = sbr.rel (0) target = $region13
    $region12: #{dqn_forward.1} parent=1 // pred_region
      _
    $region13: #{dqn_forward.1} parent=1 // pred_fallthru
      _
    // Predicated region
    $region14: #{dqn_forward.1} parent=1 // pred_check
      _
    $region15: #{dqn_forward.1} parent=1 // pred_check_branch
      %20 = sbr.rel (0) target = $region17
    $region16: #{dqn_forward.1} parent=1 // pred_region
      _
    $region17: #{dqn_forward.1} parent=1 // pred_fallthru
      _
    // Predicated region
    $region18: #{dqn_forward.1} parent=1 // pred_check
      _
    $region19: #{dqn_forward.1} parent=1 // pred_check_branch
      %22 = sbr.rel (0) target = $region21
    $region20: #{dqn_forward.1} parent=1 // pred_region
      _
    $region21: #{dqn_forward.1} parent=1 // pred_fallthru
      _
    // Predicated region
    $region22: #{dqn_forward.1} parent=1 // pred_check
      _
    $region23: #{dqn_forward.1} parent=1 // pred_check_branch
      %24 = sbr.rel (0) target = $region25
    $region24: #{dqn_forward.1} parent=1 // pred_region
      _
    $region25: #{dqn_forward.1} parent=1 // pred_fallthru
      _
    // Predicated region
    $region26: #{dqn_forward.1} parent=1 // pred_check
      _
    $region27: #{dqn_forward.1} parent=1 // pred_check_branch
      %26 = sbr.rel (0) target = $region29
    $region28: #{dqn_forward.1} parent=1 // pred_region
      _
    $region29: #{dqn_forward.1} parent=1 // pred_fallthru
      _
    %v28 = vld [vmem:[%s0] sm:$0xf]
    %v29 = vld [vmem:[%s1] sm:$0x1]
    %v30 = vld [vmem:[%s2] sm:$0x1]
    %v32 = vlaneseq
    %v33 = vshrl.u32 %v32, 7
    %v34 = vsub.s32 0, %v33
    %v35 = vrot.slane %v30, %v34
    %vm37 = vcmask 15360
    %v39 = vsel %vm37, %v28, 0
    %vm41 = vcmask 1040384
    %v43 = vsel %vm41, %v29, 0
    %45 = vmatprep.subr.bf16.mxu0 0
    %46 = vmatpush1.bf16.msra.mxu0 0
    %47 = vmatprep.subr.bf16.mxu0 0
    %48 = vmatpush1.bf16.msra.mxu0 0
    %49 = vmatprep.subr.bf16.mxu0 0
    %50 = vmatpush1.bf16.msra.mxu0 0
    %51 = vmatprep.subr.bf16.mxu0 0
    %52 = vmatpush1.bf16.msra.mxu0 0
    %53 = vmatprep.subr.bf16.mxu0 0
    %54 = vmatpush1.bf16.msra.mxu0 0
    %55 = vmatprep.subr.bf16.mxu0 0
    %56 = vmatpush1.bf16.msra.mxu0 0
    %57 = vmatprep.subr.bf16.mxu0 0
    %58 = vmatpush1.bf16.msra.mxu0 0
    %59 = vmatprep.subr.bf16.mxu0 0
    %60 = vmatpush1.bf16.msra.mxu0 %v43
    %61 = vmatprep.subr.bf16.mxu0 0
    %62 = vmatpush2.bf16.msra.mxu0 0
    %63 = vmatprep.subr.bf16.mxu0 0
    %64 = vmatpush2.bf16.msra.mxu0 0
    %65 = vmatprep.subr.bf16.mxu0 0
    %66 = vmatpush2.bf16.msra.mxu0 0
    %67 = vmatprep.subr.bf16.mxu0 0
    %68 = vmatpush2.bf16.msra.mxu0 0
    %69 = vmatprep.subr.bf16.mxu0 0
    %70 = vmatpush2.bf16.msra.mxu0 0
    %71 = vmatprep.subr.bf16.mxu0 0
    %72 = vmatpush2.bf16.msra.mxu0 0
    %73 = vmatprep.subr.bf16.mxu0 0
    %74 = vmatpush2.bf16.msra.mxu0 0
    %75 = vmatprep.subr.bf16.mxu0 0
    %76 = vmatpush2.bf16.msra.mxu0 0
    %77 = vmatprep.mubr.bf16.mxu0 0
    %78 = vmatmul.mubr.bf16.gmra.mxu0 %v39
    %v79 = vpop.f32.mrf.mxu0
    %v80 = vadd.f32 %v35, %v79
    %v81 = vpop.f32.mrf.mxu0
    %v82 = vpop.f32.mrf.mxu0
    %v83 = vpop.f32.mrf.mxu0
    %84 = vdwg.mxu0
    %v85 = vmax.f32 %v80, 0.0
    %v86 = vpack.c.bf16 %v85, %v85
    %v87 = vld [vmem:[%s3] sm:$0xf]
    %v88 = vld [vmem:[%s3 + $0x4] sm:$0xf]
    %v89 = vld [vmem:[%s3 + $0x8] sm:$0xf]
    %v90 = vld [vmem:[%s3 + $0xc] sm:$0xf]
    %v91 = vld [vmem:[%s3 + $0x10] sm:$0xf]
    %v92 = vld [vmem:[%s3 + $0x14] sm:$0xf]
    %v93 = vld [vmem:[%s3 + $0x18] sm:$0xf]
    %v94 = vld [vmem:[%s3 + $0x1c] sm:$0xf]
    %v95 = vld [vmem:[%s3 + $0x20] sm:$0xf]
    %v96 = vld [vmem:[%s3 + $0x24] sm:$0xf]
    %v97 = vld [vmem:[%s3 + $0x28] sm:$0xf]
    %v98 = vld [vmem:[%s3 + $0x2c] sm:$0xf]
    %v99 = vld [vmem:[%s3 + $0x30] sm:$0xf]
    %v100 = vld [vmem:[%s3 + $0x34] sm:$0xf]
    %v101 = vld [vmem:[%s3 + $0x38] sm:$0xf]
    %v102 = vld [vmem:[%s3 + $0x3c] sm:$0xf]
    %v103 = vld [vmem:[%s4] sm:$0x1]
    %v105 = vlaneseq
    %v106 = vshrl.u32 %v105, 7
    %v107 = vsub.s32 0, %v106
    %v108 = vrot.slane %v103, %v107
    %v126 = vunpack.c.l.b16 %v87
    %v127 = vunpack.c.l.b16 %v88
    %v128 = vunpack.c.l.b16 %v89
    %v129 = vunpack.c.l.b16 %v90
    %v130 = vunpack.c.l.b16 %v91
    %v131 = vunpack.c.l.b16 %v92
    %v132 = vunpack.c.l.b16 %v93
    %v133 = vunpack.c.l.b16 %v94
    %v134 = vunpack.c.l.b16 %v95
    %v135 = vunpack.c.l.b16 %v96
    %v136 = vunpack.c.l.b16 %v97
    %v137 = vunpack.c.l.b16 %v98
    %v138 = vunpack.c.l.b16 %v99
    %v139 = vunpack.c.l.b16 %v100
    %v140 = vunpack.c.l.b16 %v101
    %v141 = vunpack.c.l.b16 %v102
    %v142 = vpack.c.b16 %v127, %v126
    %v143 = vpack.c.b16 %v129, %v128
    %v144 = vpack.c.b16 %v131, %v130
    %v145 = vpack.c.b16 %v133, %v132
    %v146 = vpack.c.b16 %v135, %v134
    %v147 = vpack.c.b16 %v137, %v136
    %v148 = vpack.c.b16 %v139, %v138
    %v149 = vpack.c.b16 %v141, %v140
    %158 = vmatprep.subr.bf16.mxu0 0
    %159 = vmatpush1.bf16.msra.mxu0 %v149
    %160 = vmatprep.subr.bf16.mxu0 0
    %161 = vmatpush1.bf16.msra.mxu0 %v148
    %162 = vmatprep.subr.bf16.mxu0 0
    %163 = vmatpush1.bf16.msra.mxu0 %v147
    %164 = vmatprep.subr.bf16.mxu0 0
    %165 = vmatpush1.bf16.msra.mxu0 %v146
    %166 = vmatprep.subr.bf16.mxu0 0
    %167 = vmatpush1.bf16.msra.mxu0 %v145
    %168 = vmatprep.subr.bf16.mxu0 0
    %169 = vmatpush1.bf16.msra.mxu0 %v144
    %170 = vmatprep.subr.bf16.mxu0 0
    %171 = vmatpush1.bf16.msra.mxu0 %v143
    %172 = vmatprep.subr.bf16.mxu0 0
    %173 = vmatpush1.bf16.msra.mxu0 %v142
    %174 = vmatprep.subr.bf16.mxu0 0
    %175 = vmatpush2.bf16.msra.mxu0 0
    %176 = vmatprep.subr.bf16.mxu0 0
    %177 = vmatpush2.bf16.msra.mxu0 0
    %178 = vmatprep.subr.bf16.mxu0 0
    %179 = vmatpush2.bf16.msra.mxu0 0
    %180 = vmatprep.subr.bf16.mxu0 0
    %181 = vmatpush2.bf16.msra.mxu0 0
    %182 = vmatprep.subr.bf16.mxu0 0
    %183 = vmatpush2.bf16.msra.mxu0 0
    %184 = vmatprep.subr.bf16.mxu0 0
    %185 = vmatpush2.bf16.msra.mxu0 0
    %186 = vmatprep.subr.bf16.mxu0 0
    %187 = vmatpush2.bf16.msra.mxu0 0
    %188 = vmatprep.subr.bf16.mxu0 0
    %189 = vmatpush2.bf16.msra.mxu0 0
    %190 = vmatprep.mubr.bf16.mxu0 0
    %191 = vmatmul.mubr.bf16.gmra.mxu0 %v86
    %v192 = vpop.f32.mrf.mxu0
    %v193 = vadd.f32 %v108, %v192
    %v194 = vpop.f32.mrf.mxu0
    %v195 = vpop.f32.mrf.mxu0
    %v196 = vpop.f32.mrf.mxu0
    %197 = vdwg.mxu0
    %v198 = vmax.f32 %v193, 0.0
    %v199 = vpack.c.bf16 %v198, %v198
    %v200 = vld [vmem:[%s5] sm:$0xf]
    %v201 = vld [vmem:[%s5 + $0x4] sm:$0xf]
    %v202 = vld [vmem:[%s5 + $0x8] sm:$0xf]
    %v203 = vld [vmem:[%s5 + $0xc] sm:$0xf]
    %v204 = vld [vmem:[%s5 + $0x10] sm:$0xf]
    %v205 = vld [vmem:[%s5 + $0x14] sm:$0xf]
    %v206 = vld [vmem:[%s5 + $0x18] sm:$0xf]
    %v207 = vld [vmem:[%s5 + $0x1c] sm:$0xf]
    %v208 = vld [vmem:[%s6] sm:$0x1]
    %v210 = vlaneseq
    %v211 = vshrl.u32 %v210, 7
    %v212 = vsub.s32 0, %v211
    %v213 = vrot.slane %v208, %v212
    %v223 = vunpack.c.l.b16 %v200
    %v224 = vunpack.c.l.b16 %v201
    %v225 = vunpack.c.l.b16 %v202
    %v226 = vunpack.c.l.b16 %v203
    %v227 = vunpack.c.l.b16 %v204
    %v228 = vunpack.c.l.b16 %v205
    %v229 = vunpack.c.l.b16 %v206
    %v230 = vunpack.c.l.b16 %v207
    %v231 = vpack.c.b16 %v224, %v223
    %v232 = vpack.c.b16 %v226, %v225
    %v233 = vpack.c.b16 %v228, %v227
    %v234 = vpack.c.b16 %v230, %v229
    %vm239 = vcmask 523264
    %v241 = vsel %vm239, %v199, 0
    %243 = vmatprep.subr.bf16.mxu0 0
    %244 = vmatpush1.bf16.msra.mxu0 0
    %245 = vmatprep.subr.bf16.mxu0 0
    %246 = vmatpush1.bf16.msra.mxu0 0
    %247 = vmatprep.subr.bf16.mxu0 0
    %248 = vmatpush1.bf16.msra.mxu0 0
    %249 = vmatprep.subr.bf16.mxu0 0
    %250 = vmatpush1.bf16.msra.mxu0 0
    %251 = vmatprep.subr.bf16.mxu0 0
    %252 = vmatpush1.bf16.msra.mxu0 %v234
    %253 = vmatprep.subr.bf16.mxu0 0
    %254 = vmatpush1.bf16.msra.mxu0 %v233
    %255 = vmatprep.subr.bf16.mxu0 0
    %256 = vmatpush1.bf16.msra.mxu0 %v232
    %257 = vmatprep.subr.bf16.mxu0 0
    %258 = vmatpush1.bf16.msra.mxu0 %v231
    %259 = vmatprep.subr.bf16.mxu0 0
    %260 = vmatpush2.bf16.msra.mxu0 0
    %261 = vmatprep.subr.bf16.mxu0 0
    %262 = vmatpush2.bf16.msra.mxu0 0
    %263 = vmatprep.subr.bf16.mxu0 0
    %264 = vmatpush2.bf16.msra.mxu0 0
    %265 = vmatprep.subr.bf16.mxu0 0
    %266 = vmatpush2.bf16.msra.mxu0 0
    %267 = vmatprep.subr.bf16.mxu0 0
    %268 = vmatpush2.bf16.msra.mxu0 0
    %269 = vmatprep.subr.bf16.mxu0 0
    %270 = vmatpush2.bf16.msra.mxu0 0
    %271 = vmatprep.subr.bf16.mxu0 0
    %272 = vmatpush2.bf16.msra.mxu0 0
    %273 = vmatprep.subr.bf16.mxu0 0
    %274 = vmatpush2.bf16.msra.mxu0 0
    %275 = vmatprep.mubr.bf16.mxu0 0
    %276 = vmatmul.mubr.bf16.gmra.mxu0 %v241
    %v277 = vpop.f32.mrf.mxu0
    %v278 = vadd.f32 %v213, %v277
    %v279 = vpop.f32.mrf.mxu0
    %v280 = vpop.f32.mrf.mxu0
    %v281 = vpop.f32.mrf.mxu0
    %282 = vdwg.mxu0
    %vm283 = vcmask 39936
    %284 = vst.msk [vmem:[#allocation2] sm:$0xff] %vm283, %v278
    // Predicated region
    $region30: #{dqn_forward.1} parent=1 // pred_check
      _
    $region31: #{dqn_forward.1} parent=1 // pred_check_branch
      %286 = sbr.rel (0) target = $region33
    $region32: #{dqn_forward.1} parent=1 // pred_region
      %s288 = ssub.s32 128, 128
      %289 = vsyncadd [#allocation3], %s288
      %s291 = sshll.u32 [#allocation2], 4
      %s292 = int_to_ptr.vmem [resolvable:$true] %s291
      %294 = dma.vmem_to_hbm [thread:$0]  %s292, 128, %s7, [#allocation3]
    $region33: #{dqn_forward.1} parent=1 // pred_fallthru
      _
    // Predicated region
    $region34: #{dqn_forward.1} parent=1 // pred_check
      _
    $region35: #{dqn_forward.1} parent=1 // pred_check_branch
      %296 = sbr.rel (0) target = $region37
    $region36: #{dqn_forward.1} parent=1 // pred_region
      %297 = dma.done [#allocation3], 128
    $region37: #{dqn_forward.1} parent=1 // pred_fallthru
      _
    %298 = vsyncpa [#allocation3], 1

</llo_original>
